<compile_context>
chip_gen: v6e
topology: v6e:2x2x1
jax: 0.10.0
libtpu: 0.0.40
codegen_flags: <defaults>
</compile_context>

<pallas_src>
import math

import jax
import jax.numpy as jnp
from jax.experimental import pallas as pl
from jax.experimental.pallas import tpu as pltpu

# Hyperparameters (match the PyTorch script)
EMBED = 4
HEADS = 2
HEAD_DIM = EMBED // HEADS
BATCH = 3
SRC_LEN = 5
TGT_LEN = 6
SCALING = math.sqrt(1.0 / float(HEAD_DIM))


def _mha_kernel(q_ref, kt_ref, v_ref, w_ref, out_ref, attnw_ref):
    """Single-invocation kernel over the whole (tiny) problem. No MXU use.

    q_ref:  (B, T, E)   query, batch-major
    kt_ref: (B, E, S)   key, batch-major and pre-transposed (source axis on lanes)
    v_ref:  (B, S, E)   value, batch-major
    w_ref:  (5, E, E)   packed params: [Wq^T, Wk, Wv^T, Wo^T, bias (row-broadcast)]
    out_ref:   (B, T, E)  attention output (wrapper transposes back to (T, B, E))
    attnw_ref: (B, T, S)  head-averaged attention weights
    """
    B, T, E = q_ref.shape
    S = v_ref.shape[1]
    H = HEADS
    hd = E // H

    q = q_ref[...]            # (B, T, E)
    kt = kt_ref[...]          # (B, E, S)
    v = v_ref[...]            # (B, S, E)
    w_q = w_ref[0]            # (E, E) = Wq^T  (x @ w_q projects)
    w_k = w_ref[1]            # (E, E) = Wk    (untransposed; columns feed the transposed-domain MAC)
    w_v = w_ref[2]            # (E, E) = Wv^T
    w_o = w_ref[3]            # (E, E) = Wo^T
    bias = w_ref[4][0:1, :][None]   # (1, 1, E)

    def project(x, wt):
        # x: (B, L, E), wt: (E, E) with wt[i, o]; returns x @ wt as (B, L, E).
        # K = E = 4 -> unrolled VPU MAC (one broadcast multiply-add per input channel).
        acc = x[:, :, 0:1] * wt[0:1, :][None]
        for i in range(1, E):
            acc = acc + x[:, :, i:i + 1] * wt[i:i + 1, :][None]
        return acc

    # Projections for all batches & heads at once; q-scaling is one VPU multiply.
    q_p = project(q, w_q) * SCALING              # (B, T, E)
    v_p = project(v, w_v)                        # (B, S, E)

    # K projection computed directly in the transposed layout:
    #   k_pT[b, o, s] = sum_i kt[b, i, s] * Wk[o, i]
    k_pT = kt[:, 0:1, :] * w_k[:, 0:1][None]
    for i in range(1, E):
        k_pT = k_pT + kt[:, i:i + 1, :] * w_k[:, i:i + 1][None]
    # k_pT: (B, E, S)

    out_acc = jnp.zeros(out_ref.shape, jnp.float32)
    w_acc = jnp.zeros(attnw_ref.shape, jnp.float32)

    for h in range(H):                           # static, unrolled (H == 2)
        c0 = h * hd

        # scores_h[b,t,s] = sum_c q_p[b,t,c0+c] * k_pT[b,c0+c,s]   (K = hd = 2, VPU)
        s = q_p[:, :, c0:c0 + 1] * k_pT[:, c0:c0 + 1, :]
        for j in range(1, hd):
            c = c0 + j
            s = s + q_p[:, :, c:c + 1] * k_pT[:, c:c + 1, :]       # (B, T, S)

        # softmax over the source (lane) axis; dropout(p=0.0) is the identity.
        m = jnp.max(s, axis=-1, keepdims=True)
        e = jnp.exp(s - m)
        p = e / jnp.sum(e, axis=-1, keepdims=True)                 # exact (1e-5 tolerance)
        w_acc = w_acc + p

        # ctx_h[b,t,c] = sum_s p[b,t,s] * v_p[b,s,c0+c]            (K = S = 5, VPU)
        ctx = p[:, :, 0:1] * v_p[:, 0:1, c0:c0 + hd]
        for si in range(1, S):
            ctx = ctx + p[:, :, si:si + 1] * v_p[:, si:si + 1, c0:c0 + hd]   # (B, T, hd)

        # output projection accumulate: out[b,t,o] += sum_c ctx[b,t,c] * Wo^T[c0+c, o]
        for j in range(hd):
            c = c0 + j
            out_acc = out_acc + ctx[:, :, j:j + 1] * w_o[c:c + 1, :][None]

    # Each output is written exactly once. The (B,T,E)/(B,T,S) store layout is kept:
    # flattening to (B*T, .) or (1, B*T*.) in-kernel would cost a cross-tile relayout
    # at least as big as the masked partial stores it would save at this size.
    out_ref[...] = out_acc + bias
    attnw_ref[...] = w_acc * (1.0 / float(H))


@jax.jit
def multihead_attention(query, key, value, wq, wk, wv, wo, bo):
    """query: (T, B, E); key/value: (S, B, E); returns ((T, B, E), (B, T, S))."""
    T, B, E = query.shape
    S = key.shape[0]

    # Layout plumbing (tiny transposes, fused by XLA under jit): batch-major for the
    # kernel, with K pre-transposed so the in-kernel scores MAC needs no transpose.
    q_b = jnp.transpose(query, (1, 0, 2))    # (B, T, E)
    kT_b = jnp.transpose(key, (1, 2, 0))     # (B, E, S)
    v_b = jnp.transpose(value, (1, 0, 2))    # (B, S, E)

    # Pack all parameters into one array -> one input ref / DMA instead of five.
    w_packed = jnp.stack(
        [wq.T, wk, wv.T, wo.T, jnp.broadcast_to(bo, (E, E))], axis=0)   # (5, E, E)

    out_b, w_b = pl.pallas_call(
        _mha_kernel,
        out_shape=(
            jax.ShapeDtypeStruct((B, T, E), jnp.float32),
            jax.ShapeDtypeStruct((B, T, S), jnp.float32),
        ),
        compiler_params=pltpu.CompilerParams(vmem_limit_bytes=4 * 1024 * 1024),
    )(q_b, kT_b, v_b, w_packed)

    attn_output = jnp.transpose(out_b, (1, 0, 2))   # back to PyTorch (T, B, E)
    return attn_output, w_b                          # weights already (B, T, S)


def mha_reference(query, key, value, wq, wk, wv, wo, bo):
    """Pure-JAX mirror of the PyTorch forward, for verification."""
    T, B, E = query.shape
    S = key.shape[0]
    H, hd = HEADS, HEAD_DIM
    q = query @ wq.T * math.sqrt(1.0 / hd)
    k = key @ wk.T
    v = value @ wv.T
    q = q.reshape(T, B * H, hd).transpose(1, 0, 2)
    k = k.reshape(S, B * H, hd).transpose(1, 0, 2)
    v = v.reshape(S, B * H, hd).transpose(1, 0, 2)
    w = jax.nn.softmax(jnp.einsum("btd,bsd->bts", q, k), axis=-1)
    o = jnp.einsum("bts,bsd->btd", w, v)
    o = o.transpose(1, 0, 2).reshape(T, B, E)
    o = o @ wo.T + bo
    w_avg = w.reshape(B, H, T, S).sum(axis=1) / H
    return o, w_avg


if __name__ == "__main__":
    root = jax.random.PRNGKey(0)
    ks = jax.random.split(root, 8)

    query = jax.random.normal(ks[0], (TGT_LEN, BATCH, EMBED), jnp.float32)
    key_in = jax.random.normal(ks[1], (SRC_LEN, BATCH, EMBED), jnp.float32)
    value_in = jax.random.normal(ks[2], (SRC_LEN, BATCH, EMBED), jnp.float32)

    # Deterministic parameter init (nn.Linear-style uniform bounds).
    bound = 1.0 / math.sqrt(EMBED)
    wq = jax.random.uniform(ks[3], (EMBED, EMBED), jnp.float32, -bound, bound)
    wk = jax.random.uniform(ks[4], (EMBED, EMBED), jnp.float32, -bound, bound)
    wv = jax.random.uniform(ks[5], (EMBED, EMBED), jnp.float32, -bound, bound)
    wo = jax.random.uniform(ks[6], (EMBED, EMBED), jnp.float32, -bound, bound)
    bo = jax.random.uniform(ks[7], (EMBED,), jnp.float32, -bound, bound)
    # NOTE: self.out_proj_weight / self.out_proj_bias are declared in __init__ but
    # never used in forward(), so they are not materialized here.

    attn_out, attn_w = jax.block_until_ready(
        multihead_attention(query, key_in, value_in, wq, wk, wv, wo, bo))

    ref_out, ref_w = mha_reference(query, key_in, value_in, wq, wk, wv, wo, bo)
    assert attn_out.shape == (TGT_LEN, BATCH, EMBED)
    assert attn_w.shape == (BATCH, TGT_LEN, SRC_LEN)
    assert jnp.allclose(attn_out, ref_out, atol=1e-5, rtol=1e-5)
    assert jnp.allclose(attn_w, ref_w, atol=1e-5, rtol=1e-5)

    print("KERNEL_OK")
</pallas_src>

<mosaic_0001>
module attributes {stable_mosaic.version = 11 : i64} {
  func.func @_mha_kernel(%arg0: memref<3x6x4xf32, #tpu.memory_space<vmem>>, %arg1: memref<3x4x5xf32, #tpu.memory_space<vmem>>, %arg2: memref<3x5x4xf32, #tpu.memory_space<vmem>>, %arg3: memref<5x4x4xf32, #tpu.memory_space<vmem>>, %arg4: memref<3x6x4xf32, #tpu.memory_space<vmem>>, %arg5: memref<3x6x5xf32, #tpu.memory_space<vmem>>) attributes {dimension_semantics = [], scalar_prefetch = 0 : i64, scratch_operands = 0 : i64, tpu.core_type = #tpu.core_type<tc>} {
    %c0 = arith.constant 0 : index
    %c0_0 = arith.constant 0 : index
    %c0_1 = arith.constant 0 : index
    %0 = vector.load %arg0[%c0, %c0_0, %c0_1] : memref<3x6x4xf32, #tpu.memory_space<vmem>>, vector<3x6x4xf32>
    %c0_2 = arith.constant 0 : index
    %c0_3 = arith.constant 0 : index
    %c0_4 = arith.constant 0 : index
    %1 = vector.load %arg1[%c0_2, %c0_3, %c0_4] : memref<3x4x5xf32, #tpu.memory_space<vmem>>, vector<3x4x5xf32>
    %c0_5 = arith.constant 0 : index
    %c0_6 = arith.constant 0 : index
    %c0_7 = arith.constant 0 : index
    %2 = vector.load %arg2[%c0_5, %c0_6, %c0_7] : memref<3x5x4xf32, #tpu.memory_space<vmem>>, vector<3x5x4xf32>
    %c0_8 = arith.constant 0 : index
    %c0_9 = arith.constant 0 : index
    %c0_10 = arith.constant 0 : index
    %3 = vector.load %arg3[%c0_8, %c0_9, %c0_10] : memref<5x4x4xf32, #tpu.memory_space<vmem>>, vector<1x4x4xf32>
    %4 = vector.shape_cast %3 : vector<1x4x4xf32> to vector<4x4xf32>
    %c1 = arith.constant 1 : index
    %c0_11 = arith.constant 0 : index
    %c0_12 = arith.constant 0 : index
    %5 = vector.load %arg3[%c1, %c0_11, %c0_12] : memref<5x4x4xf32, #tpu.memory_space<vmem>>, vector<1x4x4xf32>
    %6 = vector.shape_cast %5 : vector<1x4x4xf32> to vector<4x4xf32>
    %c2 = arith.constant 2 : index
    %c0_13 = arith.constant 0 : index
    %c0_14 = arith.constant 0 : index
    %7 = vector.load %arg3[%c2, %c0_13, %c0_14] : memref<5x4x4xf32, #tpu.memory_space<vmem>>, vector<1x4x4xf32>
    %8 = vector.shape_cast %7 : vector<1x4x4xf32> to vector<4x4xf32>
    %c3 = arith.constant 3 : index
    %c0_15 = arith.constant 0 : index
    %c0_16 = arith.constant 0 : index
    %9 = vector.load %arg3[%c3, %c0_15, %c0_16] : memref<5x4x4xf32, #tpu.memory_space<vmem>>, vector<1x4x4xf32>
    %10 = vector.shape_cast %9 : vector<1x4x4xf32> to vector<4x4xf32>
    %c4 = arith.constant 4 : index
    %c0_17 = arith.constant 0 : index
    %c0_18 = arith.constant 0 : index
    %11 = vector.load %arg3[%c4, %c0_17, %c0_18] : memref<5x4x4xf32, #tpu.memory_space<vmem>>, vector<1x4x4xf32>
    %12 = vector.shape_cast %11 : vector<1x4x4xf32> to vector<4x4xf32>
    %13 = vector.extract_strided_slice %12 {offsets = [0, 0], sizes = [1, 4], strides = [1, 1]} : vector<4x4xf32> to vector<1x4xf32>
    %14 = vector.shape_cast %13 : vector<1x4xf32> to vector<1x1x4xf32>
    %15 = vector.extract_strided_slice %0 {offsets = [0, 0, 0], sizes = [3, 6, 1], strides = [1, 1, 1]} : vector<3x6x4xf32> to vector<3x6x1xf32>
    %16 = vector.extract_strided_slice %4 {offsets = [0, 0], sizes = [1, 4], strides = [1, 1]} : vector<4x4xf32> to vector<1x4xf32>
    %17 = vector.shape_cast %16 : vector<1x4xf32> to vector<1x1x4xf32>
    %18 = vector.broadcast %15 : vector<3x6x1xf32> to vector<3x6x4xf32>
    %19 = vector.broadcast %17 : vector<1x1x4xf32> to vector<3x6x4xf32>
    %20 = arith.mulf %18, %19 : vector<3x6x4xf32>
    %21 = vector.extract_strided_slice %0 {offsets = [0, 0, 1], sizes = [3, 6, 1], strides = [1, 1, 1]} : vector<3x6x4xf32> to vector<3x6x1xf32>
    %22 = vector.extract_strided_slice %4 {offsets = [1, 0], sizes = [1, 4], strides = [1, 1]} : vector<4x4xf32> to vector<1x4xf32>
    %23 = vector.shape_cast %22 : vector<1x4xf32> to vector<1x1x4xf32>
    %24 = vector.broadcast %21 : vector<3x6x1xf32> to vector<3x6x4xf32>
    %25 = vector.broadcast %23 : vector<1x1x4xf32> to vector<3x6x4xf32>
    %26 = arith.mulf %24, %25 : vector<3x6x4xf32>
    %27 = arith.addf %20, %26 : vector<3x6x4xf32>
    %28 = vector.extract_strided_slice %0 {offsets = [0, 0, 2], sizes = [3, 6, 1], strides = [1, 1, 1]} : vector<3x6x4xf32> to vector<3x6x1xf32>
    %29 = vector.extract_strided_slice %4 {offsets = [2, 0], sizes = [1, 4], strides = [1, 1]} : vector<4x4xf32> to vector<1x4xf32>
    %30 = vector.shape_cast %29 : vector<1x4xf32> to vector<1x1x4xf32>
    %31 = vector.broadcast %28 : vector<3x6x1xf32> to vector<3x6x4xf32>
    %32 = vector.broadcast %30 : vector<1x1x4xf32> to vector<3x6x4xf32>
    %33 = arith.mulf %31, %32 : vector<3x6x4xf32>
    %34 = arith.addf %27, %33 : vector<3x6x4xf32>
    %35 = vector.extract_strided_slice %0 {offsets = [0, 0, 3], sizes = [3, 6, 1], strides = [1, 1, 1]} : vector<3x6x4xf32> to vector<3x6x1xf32>
    %36 = vector.extract_strided_slice %4 {offsets = [3, 0], sizes = [1, 4], strides = [1, 1]} : vector<4x4xf32> to vector<1x4xf32>
    %37 = vector.shape_cast %36 : vector<1x4xf32> to vector<1x1x4xf32>
    %38 = vector.broadcast %35 : vector<3x6x1xf32> to vector<3x6x4xf32>
    %39 = vector.broadcast %37 : vector<1x1x4xf32> to vector<3x6x4xf32>
    %40 = arith.mulf %38, %39 : vector<3x6x4xf32>
    %41 = arith.addf %34, %40 : vector<3x6x4xf32>
    %cst = arith.constant 0.707106769 : f32
    %42 = vector.broadcast %cst : f32 to vector<3x6x4xf32>
    %43 = arith.mulf %41, %42 : vector<3x6x4xf32>
    %44 = vector.extract_strided_slice %2 {offsets = [0, 0, 0], sizes = [3, 5, 1], strides = [1, 1, 1]} : vector<3x5x4xf32> to vector<3x5x1xf32>
    %45 = vector.extract_strided_slice %8 {offsets = [0, 0], sizes = [1, 4], strides = [1, 1]} : vector<4x4xf32> to vector<1x4xf32>
    %46 = vector.shape_cast %45 : vector<1x4xf32> to vector<1x1x4xf32>
    %47 = vector.broadcast %44 : vector<3x5x1xf32> to vector<3x5x4xf32>
    %48 = vector.broadcast %46 : vector<1x1x4xf32> to vector<3x5x4xf32>
    %49 = arith.mulf %47, %48 : vector<3x5x4xf32>
    %50 = vector.extract_strided_slice %2 {offsets = [0, 0, 1], sizes = [3, 5, 1], strides = [1, 1, 1]} : vector<3x5x4xf32> to vector<3x5x1xf32>
    %51 = vector.extract_strided_slice %8 {offsets = [1, 0], sizes = [1, 4], strides = [1, 1]} : vector<4x4xf32> to vector<1x4xf32>
    %52 = vector.shape_cast %51 : vector<1x4xf32> to vector<1x1x4xf32>
    %53 = vector.broadcast %50 : vector<3x5x1xf32> to vector<3x5x4xf32>
    %54 = vector.broadcast %52 : vector<1x1x4xf32> to vector<3x5x4xf32>
    %55 = arith.mulf %53, %54 : vector<3x5x4xf32>
    %56 = arith.addf %49, %55 : vector<3x5x4xf32>
    %57 = vector.extract_strided_slice %2 {offsets = [0, 0, 2], sizes = [3, 5, 1], strides = [1, 1, 1]} : vector<3x5x4xf32> to vector<3x5x1xf32>
    %58 = vector.extract_strided_slice %8 {offsets = [2, 0], sizes = [1, 4], strides = [1, 1]} : vector<4x4xf32> to vector<1x4xf32>
    %59 = vector.shape_cast %58 : vector<1x4xf32> to vector<1x1x4xf32>
    %60 = vector.broadcast %57 : vector<3x5x1xf32> to vector<3x5x4xf32>
    %61 = vector.broadcast %59 : vector<1x1x4xf32> to vector<3x5x4xf32>
    %62 = arith.mulf %60, %61 : vector<3x5x4xf32>
    %63 = arith.addf %56, %62 : vector<3x5x4xf32>
    %64 = vector.extract_strided_slice %2 {offsets = [0, 0, 3], sizes = [3, 5, 1], strides = [1, 1, 1]} : vector<3x5x4xf32> to vector<3x5x1xf32>
    %65 = vector.extract_strided_slice %8 {offsets = [3, 0], sizes = [1, 4], strides = [1, 1]} : vector<4x4xf32> to vector<1x4xf32>
    %66 = vector.shape_cast %65 : vector<1x4xf32> to vector<1x1x4xf32>
    %67 = vector.broadcast %64 : vector<3x5x1xf32> to vector<3x5x4xf32>
    %68 = vector.broadcast %66 : vector<1x1x4xf32> to vector<3x5x4xf32>
    %69 = arith.mulf %67, %68 : vector<3x5x4xf32>
    %70 = arith.addf %63, %69 : vector<3x5x4xf32>
    %71 = vector.extract_strided_slice %1 {offsets = [0, 0, 0], sizes = [3, 1, 5], strides = [1, 1, 1]} : vector<3x4x5xf32> to vector<3x1x5xf32>
    %72 = vector.extract_strided_slice %6 {offsets = [0, 0], sizes = [4, 1], strides = [1, 1]} : vector<4x4xf32> to vector<4x1xf32>
    %73 = vector.shape_cast %72 : vector<4x1xf32> to vector<1x4x1xf32>
    %74 = vector.broadcast %71 : vector<3x1x5xf32> to vector<3x4x5xf32>
    %75 = vector.broadcast %73 : vector<1x4x1xf32> to vector<3x4x5xf32>
    %76 = arith.mulf %74, %75 : vector<3x4x5xf32>
    %77 = vector.extract_strided_slice %1 {offsets = [0, 1, 0], sizes = [3, 1, 5], strides = [1, 1, 1]} : vector<3x4x5xf32> to vector<3x1x5xf32>
    %78 = vector.extract_strided_slice %6 {offsets = [0, 1], sizes = [4, 1], strides = [1, 1]} : vector<4x4xf32> to vector<4x1xf32>
    %79 = vector.shape_cast %78 : vector<4x1xf32> to vector<1x4x1xf32>
    %80 = vector.broadcast %77 : vector<3x1x5xf32> to vector<3x4x5xf32>
    %81 = vector.broadcast %79 : vector<1x4x1xf32> to vector<3x4x5xf32>
    %82 = arith.mulf %80, %81 : vector<3x4x5xf32>
    %83 = arith.addf %76, %82 : vector<3x4x5xf32>
    %84 = vector.extract_strided_slice %1 {offsets = [0, 2, 0], sizes = [3, 1, 5], strides = [1, 1, 1]} : vector<3x4x5xf32> to vector<3x1x5xf32>
    %85 = vector.extract_strided_slice %6 {offsets = [0, 2], sizes = [4, 1], strides = [1, 1]} : vector<4x4xf32> to vector<4x1xf32>
    %86 = vector.shape_cast %85 : vector<4x1xf32> to vector<1x4x1xf32>
    %87 = vector.broadcast %84 : vector<3x1x5xf32> to vector<3x4x5xf32>
    %88 = vector.broadcast %86 : vector<1x4x1xf32> to vector<3x4x5xf32>
    %89 = arith.mulf %87, %88 : vector<3x4x5xf32>
    %90 = arith.addf %83, %89 : vector<3x4x5xf32>
    %91 = vector.extract_strided_slice %1 {offsets = [0, 3, 0], sizes = [3, 1, 5], strides = [1, 1, 1]} : vector<3x4x5xf32> to vector<3x1x5xf32>
    %92 = vector.extract_strided_slice %6 {offsets = [0, 3], sizes = [4, 1], strides = [1, 1]} : vector<4x4xf32> to vector<4x1xf32>
    %93 = vector.shape_cast %92 : vector<4x1xf32> to vector<1x4x1xf32>
    %94 = vector.broadcast %91 : vector<3x1x5xf32> to vector<3x4x5xf32>
    %95 = vector.broadcast %93 : vector<1x4x1xf32> to vector<3x4x5xf32>
    %96 = arith.mulf %94, %95 : vector<3x4x5xf32>
    %97 = arith.addf %90, %96 : vector<3x4x5xf32>
    %cst_19 = arith.constant 0.000000e+00 : f32
    %98 = vector.broadcast %cst_19 : f32 to vector<3x6x4xf32>
    %cst_20 = arith.constant 0.000000e+00 : f32
    %99 = vector.broadcast %cst_20 : f32 to vector<3x6x5xf32>
    %100 = vector.extract_strided_slice %43 {offsets = [0, 0, 0], sizes = [3, 6, 1], strides = [1, 1, 1]} : vector<3x6x4xf32> to vector<3x6x1xf32>
    %101 = vector.extract_strided_slice %97 {offsets = [0, 0, 0], sizes = [3, 1, 5], strides = [1, 1, 1]} : vector<3x4x5xf32> to vector<3x1x5xf32>
    %102 = vector.broadcast %100 : vector<3x6x1xf32> to vector<3x6x5xf32>
    %103 = vector.broadcast %101 : vector<3x1x5xf32> to vector<3x6x5xf32>
    %104 = arith.mulf %102, %103 : vector<3x6x5xf32>
    %105 = vector.extract_strided_slice %43 {offsets = [0, 0, 1], sizes = [3, 6, 1], strides = [1, 1, 1]} : vector<3x6x4xf32> to vector<3x6x1xf32>
    %106 = vector.extract_strided_slice %97 {offsets = [0, 1, 0], sizes = [3, 1, 5], strides = [1, 1, 1]} : vector<3x4x5xf32> to vector<3x1x5xf32>
    %107 = vector.broadcast %105 : vector<3x6x1xf32> to vector<3x6x5xf32>
    %108 = vector.broadcast %106 : vector<3x1x5xf32> to vector<3x6x5xf32>
    %109 = arith.mulf %107, %108 : vector<3x6x5xf32>
    %110 = arith.addf %104, %109 : vector<3x6x5xf32>
    %cst_21 = arith.constant dense<0xFF800000> : vector<3x6xf32>
    %111 = vector.multi_reduction <maximumf>, %110, %cst_21 [2] : vector<3x6x5xf32> to vector<3x6xf32>
    %112 = vector.shape_cast %111 : vector<3x6xf32> to vector<3x6x1xf32>
    %113 = vector.broadcast %112 : vector<3x6x1xf32> to vector<3x6x5xf32>
    %114 = arith.subf %110, %113 : vector<3x6x5xf32>
    %115 = math.exp %114 : vector<3x6x5xf32>
    %cst_22 = arith.constant dense<0.000000e+00> : vector<3x6xf32>
    %116 = vector.multi_reduction <add>, %115, %cst_22 [2] : vector<3x6x5xf32> to vector<3x6xf32>
    %117 = vector.shape_cast %116 : vector<3x6xf32> to vector<3x6x1xf32>
    %118 = vector.broadcast %117 : vector<3x6x1xf32> to vector<3x6x5xf32>
    %119 = arith.divf %115, %118 : vector<3x6x5xf32>
    %120 = arith.addf %99, %119 : vector<3x6x5xf32>
    %121 = vector.extract_strided_slice %119 {offsets = [0, 0, 0], sizes = [3, 6, 1], strides = [1, 1, 1]} : vector<3x6x5xf32> to vector<3x6x1xf32>
    %122 = vector.extract_strided_slice %70 {offsets = [0, 0, 0], sizes = [3, 1, 2], strides = [1, 1, 1]} : vector<3x5x4xf32> to vector<3x1x2xf32>
    %123 = vector.broadcast %121 : vector<3x6x1xf32> to vector<3x6x2xf32>
    %124 = vector.broadcast %122 : vector<3x1x2xf32> to vector<3x6x2xf32>
    %125 = arith.mulf %123, %124 : vector<3x6x2xf32>
    %126 = vector.extract_strided_slice %119 {offsets = [0, 0, 1], sizes = [3, 6, 1], strides = [1, 1, 1]} : vector<3x6x5xf32> to vector<3x6x1xf32>
    %127 = vector.extract_strided_slice %70 {offsets = [0, 1, 0], sizes = [3, 1, 2], strides = [1, 1, 1]} : vector<3x5x4xf32> to vector<3x1x2xf32>
    %128 = vector.broadcast %126 : vector<3x6x1xf32> to vector<3x6x2xf32>
    %129 = vector.broadcast %127 : vector<3x1x2xf32> to vector<3x6x2xf32>
    %130 = arith.mulf %128, %129 : vector<3x6x2xf32>
    %131 = arith.addf %125, %130 : vector<3x6x2xf32>
    %132 = vector.extract_strided_slice %119 {offsets = [0, 0, 2], sizes = [3, 6, 1], strides = [1, 1, 1]} : vector<3x6x5xf32> to vector<3x6x1xf32>
    %133 = vector.extract_strided_slice %70 {offsets = [0, 2, 0], sizes = [3, 1, 2], strides = [1, 1, 1]} : vector<3x5x4xf32> to vector<3x1x2xf32>
    %134 = vector.broadcast %132 : vector<3x6x1xf32> to vector<3x6x2xf32>
    %135 = vector.broadcast %133 : vector<3x1x2xf32> to vector<3x6x2xf32>
    %136 = arith.mulf %134, %135 : vector<3x6x2xf32>
    %137 = arith.addf %131, %136 : vector<3x6x2xf32>
    %138 = vector.extract_strided_slice %119 {offsets = [0, 0, 3], sizes = [3, 6, 1], strides = [1, 1, 1]} : vector<3x6x5xf32> to vector<3x6x1xf32>
    %139 = vector.extract_strided_slice %70 {offsets = [0, 3, 0], sizes = [3, 1, 2], strides = [1, 1, 1]} : vector<3x5x4xf32> to vector<3x1x2xf32>
    %140 = vector.broadcast %138 : vector<3x6x1xf32> to vector<3x6x2xf32>
    %141 = vector.broadcast %139 : vector<3x1x2xf32> to vector<3x6x2xf32>
    %142 = arith.mulf %140, %141 : vector<3x6x2xf32>
    %143 = arith.addf %137, %142 : vector<3x6x2xf32>
    %144 = vector.extract_strided_slice %119 {offsets = [0, 0, 4], sizes = [3, 6, 1], strides = [1, 1, 1]} : vector<3x6x5xf32> to vector<3x6x1xf32>
    %145 = vector.extract_strided_slice %70 {offsets = [0, 4, 0], sizes = [3, 1, 2], strides = [1, 1, 1]} : vector<3x5x4xf32> to vector<3x1x2xf32>
    %146 = vector.broadcast %144 : vector<3x6x1xf32> to vector<3x6x2xf32>
    %147 = vector.broadcast %145 : vector<3x1x2xf32> to vector<3x6x2xf32>
    %148 = arith.mulf %146, %147 : vector<3x6x2xf32>
    %149 = arith.addf %143, %148 : vector<3x6x2xf32>
    %150 = vector.extract_strided_slice %149 {offsets = [0, 0, 0], sizes = [3, 6, 1], strides = [1, 1, 1]} : vector<3x6x2xf32> to vector<3x6x1xf32>
    %151 = vector.extract_strided_slice %10 {offsets = [0, 0], sizes = [1, 4], strides = [1, 1]} : vector<4x4xf32> to vector<1x4xf32>
    %152 = vector.shape_cast %151 : vector<1x4xf32> to vector<1x1x4xf32>
    %153 = vector.broadcast %150 : vector<3x6x1xf32> to vector<3x6x4xf32>
    %154 = vector.broadcast %152 : vector<1x1x4xf32> to vector<3x6x4xf32>
    %155 = arith.mulf %153, %154 : vector<3x6x4xf32>
    %156 = arith.addf %98, %155 : vector<3x6x4xf32>
    %157 = vector.extract_strided_slice %149 {offsets = [0, 0, 1], sizes = [3, 6, 1], strides = [1, 1, 1]} : vector<3x6x2xf32> to vector<3x6x1xf32>
    %158 = vector.extract_strided_slice %10 {offsets = [1, 0], sizes = [1, 4], strides = [1, 1]} : vector<4x4xf32> to vector<1x4xf32>
    %159 = vector.shape_cast %158 : vector<1x4xf32> to vector<1x1x4xf32>
    %160 = vector.broadcast %157 : vector<3x6x1xf32> to vector<3x6x4xf32>
    %161 = vector.broadcast %159 : vector<1x1x4xf32> to vector<3x6x4xf32>
    %162 = arith.mulf %160, %161 : vector<3x6x4xf32>
    %163 = arith.addf %156, %162 : vector<3x6x4xf32>
    %164 = vector.extract_strided_slice %43 {offsets = [0, 0, 2], sizes = [3, 6, 1], strides = [1, 1, 1]} : vector<3x6x4xf32> to vector<3x6x1xf32>
    %165 = vector.extract_strided_slice %97 {offsets = [0, 2, 0], sizes = [3, 1, 5], strides = [1, 1, 1]} : vector<3x4x5xf32> to vector<3x1x5xf32>
    %166 = vector.broadcast %164 : vector<3x6x1xf32> to vector<3x6x5xf32>
    %167 = vector.broadcast %165 : vector<3x1x5xf32> to vector<3x6x5xf32>
    %168 = arith.mulf %166, %167 : vector<3x6x5xf32>
    %169 = vector.extract_strided_slice %43 {offsets = [0, 0, 3], sizes = [3, 6, 1], strides = [1, 1, 1]} : vector<3x6x4xf32> to vector<3x6x1xf32>
    %170 = vector.extract_strided_slice %97 {offsets = [0, 3, 0], sizes = [3, 1, 5], strides = [1, 1, 1]} : vector<3x4x5xf32> to vector<3x1x5xf32>
    %171 = vector.broadcast %169 : vector<3x6x1xf32> to vector<3x6x5xf32>
    %172 = vector.broadcast %170 : vector<3x1x5xf32> to vector<3x6x5xf32>
    %173 = arith.mulf %171, %172 : vector<3x6x5xf32>
    %174 = arith.addf %168, %173 : vector<3x6x5xf32>
    %cst_23 = arith.constant dense<0xFF800000> : vector<3x6xf32>
    %175 = vector.multi_reduction <maximumf>, %174, %cst_23 [2] : vector<3x6x5xf32> to vector<3x6xf32>
    %176 = vector.shape_cast %175 : vector<3x6xf32> to vector<3x6x1xf32>
    %177 = vector.broadcast %176 : vector<3x6x1xf32> to vector<3x6x5xf32>
    %178 = arith.subf %174, %177 : vector<3x6x5xf32>
    %179 = math.exp %178 : vector<3x6x5xf32>
    %cst_24 = arith.constant dense<0.000000e+00> : vector<3x6xf32>
    %180 = vector.multi_reduction <add>, %179, %cst_24 [2] : vector<3x6x5xf32> to vector<3x6xf32>
    %181 = vector.shape_cast %180 : vector<3x6xf32> to vector<3x6x1xf32>
    %182 = vector.broadcast %181 : vector<3x6x1xf32> to vector<3x6x5xf32>
    %183 = arith.divf %179, %182 : vector<3x6x5xf32>
    %184 = arith.addf %120, %183 : vector<3x6x5xf32>
    %185 = vector.extract_strided_slice %183 {offsets = [0, 0, 0], sizes = [3, 6, 1], strides = [1, 1, 1]} : vector<3x6x5xf32> to vector<3x6x1xf32>
    %186 = vector.extract_strided_slice %70 {offsets = [0, 0, 2], sizes = [3, 1, 2], strides = [1, 1, 1]} : vector<3x5x4xf32> to vector<3x1x2xf32>
    %187 = vector.broadcast %185 : vector<3x6x1xf32> to vector<3x6x2xf32>
    %188 = vector.broadcast %186 : vector<3x1x2xf32> to vector<3x6x2xf32>
    %189 = arith.mulf %187, %188 : vector<3x6x2xf32>
    %190 = vector.extract_strided_slice %183 {offsets = [0, 0, 1], sizes = [3, 6, 1], strides = [1, 1, 1]} : vector<3x6x5xf32> to vector<3x6x1xf32>
    %191 = vector.extract_strided_slice %70 {offsets = [0, 1, 2], sizes = [3, 1, 2], strides = [1, 1, 1]} : vector<3x5x4xf32> to vector<3x1x2xf32>
    %192 = vector.broadcast %190 : vector<3x6x1xf32> to vector<3x6x2xf32>
    %193 = vector.broadcast %191 : vector<3x1x2xf32> to vector<3x6x2xf32>
    %194 = arith.mulf %192, %193 : vector<3x6x2xf32>
    %195 = arith.addf %189, %194 : vector<3x6x2xf32>
    %196 = vector.extract_strided_slice %183 {offsets = [0, 0, 2], sizes = [3, 6, 1], strides = [1, 1, 1]} : vector<3x6x5xf32> to vector<3x6x1xf32>
    %197 = vector.extract_strided_slice %70 {offsets = [0, 2, 2], sizes = [3, 1, 2], strides = [1, 1, 1]} : vector<3x5x4xf32> to vector<3x1x2xf32>
    %198 = vector.broadcast %196 : vector<3x6x1xf32> to vector<3x6x2xf32>
    %199 = vector.broadcast %197 : vector<3x1x2xf32> to vector<3x6x2xf32>
    %200 = arith.mulf %198, %199 : vector<3x6x2xf32>
    %201 = arith.addf %195, %200 : vector<3x6x2xf32>
    %202 = vector.extract_strided_slice %183 {offsets = [0, 0, 3], sizes = [3, 6, 1], strides = [1, 1, 1]} : vector<3x6x5xf32> to vector<3x6x1xf32>
    %203 = vector.extract_strided_slice %70 {offsets = [0, 3, 2], sizes = [3, 1, 2], strides = [1, 1, 1]} : vector<3x5x4xf32> to vector<3x1x2xf32>
    %204 = vector.broadcast %202 : vector<3x6x1xf32> to vector<3x6x2xf32>
    %205 = vector.broadcast %203 : vector<3x1x2xf32> to vector<3x6x2xf32>
    %206 = arith.mulf %204, %205 : vector<3x6x2xf32>
    %207 = arith.addf %201, %206 : vector<3x6x2xf32>
    %208 = vector.extract_strided_slice %183 {offsets = [0, 0, 4], sizes = [3, 6, 1], strides = [1, 1, 1]} : vector<3x6x5xf32> to vector<3x6x1xf32>
    %209 = vector.extract_strided_slice %70 {offsets = [0, 4, 2], sizes = [3, 1, 2], strides = [1, 1, 1]} : vector<3x5x4xf32> to vector<3x1x2xf32>
    %210 = vector.broadcast %208 : vector<3x6x1xf32> to vector<3x6x2xf32>
    %211 = vector.broadcast %209 : vector<3x1x2xf32> to vector<3x6x2xf32>
    %212 = arith.mulf %210, %211 : vector<3x6x2xf32>
    %213 = arith.addf %207, %212 : vector<3x6x2xf32>
    %214 = vector.extract_strided_slice %213 {offsets = [0, 0, 0], sizes = [3, 6, 1], strides = [1, 1, 1]} : vector<3x6x2xf32> to vector<3x6x1xf32>
    %215 = vector.extract_strided_slice %10 {offsets = [2, 0], sizes = [1, 4], strides = [1, 1]} : vector<4x4xf32> to vector<1x4xf32>
    %216 = vector.shape_cast %215 : vector<1x4xf32> to vector<1x1x4xf32>
    %217 = vector.broadcast %214 : vector<3x6x1xf32> to vector<3x6x4xf32>
    %218 = vector.broadcast %216 : vector<1x1x4xf32> to vector<3x6x4xf32>
    %219 = arith.mulf %217, %218 : vector<3x6x4xf32>
    %220 = arith.addf %163, %219 : vector<3x6x4xf32>
    %221 = vector.extract_strided_slice %213 {offsets = [0, 0, 1], sizes = [3, 6, 1], strides = [1, 1, 1]} : vector<3x6x2xf32> to vector<3x6x1xf32>
    %222 = vector.extract_strided_slice %10 {offsets = [3, 0], sizes = [1, 4], strides = [1, 1]} : vector<4x4xf32> to vector<1x4xf32>
    %223 = vector.shape_cast %222 : vector<1x4xf32> to vector<1x1x4xf32>
    %224 = vector.broadcast %221 : vector<3x6x1xf32> to vector<3x6x4xf32>
    %225 = vector.broadcast %223 : vector<1x1x4xf32> to vector<3x6x4xf32>
    %226 = arith.mulf %224, %225 : vector<3x6x4xf32>
    %227 = arith.addf %220, %226 : vector<3x6x4xf32>
    %228 = vector.broadcast %14 : vector<1x1x4xf32> to vector<3x6x4xf32>
    %229 = arith.addf %227, %228 : vector<3x6x4xf32>
    %c0_25 = arith.constant 0 : index
    %c0_26 = arith.constant 0 : index
    %c0_27 = arith.constant 0 : index
    %230 = vector.load %arg4[%c0_25, %c0_26, %c0_27] : memref<3x6x4xf32, #tpu.memory_space<vmem>>, vector<3x6x4xf32>
    tpu.vector_store %arg4[%c0_25, %c0_26, %c0_27], %229 {strides = array<i32>} : memref<3x6x4xf32, #tpu.memory_space<vmem>>, vector<3x6x4xf32>,
    %cst_28 = arith.constant 5.000000e-01 : f32
    %231 = vector.broadcast %cst_28 : f32 to vector<3x6x5xf32>
    %232 = arith.mulf %184, %231 : vector<3x6x5xf32>
    %c0_29 = arith.constant 0 : index
    %c0_30 = arith.constant 0 : index
    %c0_31 = arith.constant 0 : index
    %233 = vector.load %arg5[%c0_29, %c0_30, %c0_31] : memref<3x6x5xf32, #tpu.memory_space<vmem>>, vector<3x6x5xf32>
    tpu.vector_store %arg5[%c0_29, %c0_30, %c0_31], %232 {strides = array<i32>} : memref<3x6x5xf32, #tpu.memory_space<vmem>>, vector<3x6x5xf32>,
    return
  }
}

</mosaic_0001>

<llo_original>
// kernel: multihead_attention.1
$region0: #{multihead_attention.1}
  #allocation0 [shape = 'u32[]', space=smem, size = 0x4, offset = 0x4, fixed_abs, tag = 'smem constant byte address 0x4 - core index']
  #allocation1 [shape = 'u32[144,128]{1,0:T(1,128)}', space=vmem, size = 0x12000, scoped, tag = 'internal scratch']
  %s0 = inlined_call_operand.vmem [shape: f32[3,6,4], index: 0, kind: input, shape index: {}]
  %s1 = inlined_call_operand.vmem [shape: f32[3,4,5], index: 1, kind: input, shape index: {}]
  %s2 = inlined_call_operand.vmem [shape: f32[3,5,4], index: 2, kind: input, shape index: {}]
  %s3 = inlined_call_operand.vmem [shape: f32[5,4,4], index: 3, kind: input, shape index: {}]
  %s4 = inlined_call_operand.vmem [shape: f32[3,6,4], index: 4, kind: output, shape index: {0}]
  %s5 = inlined_call_operand.vmem [shape: f32[3,6,5], index: 5, kind: output, shape index: {1}]
  %6 = xla_tuple %s4, %s5
  %s7 = sld [smem:[#allocation0]]
  $region34: #{multihead_attention.1} parent=0
    _
  %s9 = ssub.s32 1, %s7
  %s10 = scalar_select 0, %s9, %s7
  // Predicated region
  $region2: #{multihead_attention.1} parent=0 // pred_check
    _
  $region3: #{multihead_attention.1} parent=0 // pred_check_branch
    %12 = sbr.rel (0) target = $region5
  $region4: #{multihead_attention.1} parent=0 // pred_region
    _
  $region5: #{multihead_attention.1} parent=0 // pred_fallthru
    _
  // Predicated region
  $region6: #{multihead_attention.1} parent=0 // pred_check
    _
  $region7: #{multihead_attention.1} parent=0 // pred_check_branch
    %14 = sbr.rel (0) target = $region9
  $region8: #{multihead_attention.1} parent=0 // pred_region
    _
  $region9: #{multihead_attention.1} parent=0 // pred_fallthru
    _
  // Predicated region
  $region10: #{multihead_attention.1} parent=0 // pred_check
    _
  $region11: #{multihead_attention.1} parent=0 // pred_check_branch
    %16 = sbr.rel (0) target = $region13
  $region12: #{multihead_attention.1} parent=0 // pred_region
    _
  $region13: #{multihead_attention.1} parent=0 // pred_fallthru
    _
  // Predicated region
  $region14: #{multihead_attention.1} parent=0 // pred_check
    _
  $region15: #{multihead_attention.1} parent=0 // pred_check_branch
    %18 = sbr.rel (0) target = $region17
  $region16: #{multihead_attention.1} parent=0 // pred_region
    _
  $region17: #{multihead_attention.1} parent=0 // pred_fallthru
    _
  %v19 = vld [vmem:[%s0] sm:$0x3f]
  %v20 = vld [vmem:[%s0 + $0x8] sm:$0x3f]
  %v21 = vld [vmem:[%s0 + $0x10] sm:$0x3f]
  %v22 = vld [vmem:[%s1] sm:$0xf]
  %v23 = vld [vmem:[%s1 + $0x4] sm:$0xf]
  %v24 = vld [vmem:[%s1 + $0x8] sm:$0xf]
  %v25 = vld [vmem:[%s2] sm:$0x1f]
  %v26 = vld [vmem:[%s2 + $0x8] sm:$0x1f]
  %v27 = vld [vmem:[%s2 + $0x10] sm:$0x1f]
  %v28 = vld [vmem:[%s3] sm:$0xf]
  %s29 = scalar_lea.vmem %s3, 4
  %v30 = vld [vmem:[%s29] sm:$0xf]
  %s31 = scalar_lea.vmem %s3, 8
  %v32 = vld [vmem:[%s31] sm:$0xf]
  %s33 = scalar_lea.vmem %s3, 12
  %v34 = vld [vmem:[%s33] sm:$0xf]
  %s35 = scalar_lea.vmem %s3, 16
  %v36 = vld [vmem:[%s35] sm:$0xf]
  %38 = vset.pattern.permute.xlu0 0
  %39 = vperm.xlu0 %38, %v19
  %v40 = vpop.permute.xlu0 %39
  %43 = vset.pattern.permute.xlu0 0
  %44 = vperm.xlu0 %43, %v20
  %v45 = vpop.permute.xlu0 %44
  %48 = vset.pattern.permute.xlu0 0
  %49 = vperm.xlu0 %48, %v21
  %v50 = vpop.permute.xlu0 %49
  %v52 = vlaneseq
  %v53 = vshrl.u32 %v52, 7
  %v54 = vsub.s32 0, %v53
  %v55 = vrot.slane %v28, %v54
  %v56 = vmul.f32 %v40, %v55
  %v57 = vmul.f32 %v45, %v55
  %v58 = vmul.f32 %v50, %v55
  %59 = vset.pattern.permute.xlu0 1
  %60 = vperm.xlu0 %59, %v19
  %v61 = vpop.permute.xlu0 %60
  %63 = vset.pattern.permute.xlu0 1
  %64 = vperm.xlu0 %63, %v20
  %v65 = vpop.permute.xlu0 %64
  %67 = vset.pattern.permute.xlu0 1
  %68 = vperm.xlu0 %67, %v21
  %v69 = vpop.permute.xlu0 %68
  %v71 = vlaneseq
  %v72 = vshrl.u32 %v71, 7
  %v73 = vsub.s32 1, %v72
  %v74 = vrot.slane %v28, %v73
  %v75 = vmul.f32 %v61, %v74
  %v76 = vmul.f32 %v65, %v74
  %v77 = vmul.f32 %v69, %v74
  %v78 = vadd.f32 %v56, %v75
  %v79 = vadd.f32 %v57, %v76
  %v80 = vadd.f32 %v58, %v77
  %81 = vset.pattern.permute.xlu0 2
  %82 = vperm.xlu0 %81, %v19
  %v83 = vpop.permute.xlu0 %82
  %85 = vset.pattern.permute.xlu0 2
  %86 = vperm.xlu0 %85, %v20
  %v87 = vpop.permute.xlu0 %86
  %89 = vset.pattern.permute.xlu0 2
  %90 = vperm.xlu0 %89, %v21
  %v91 = vpop.permute.xlu0 %90
  %v93 = vlaneseq
  %v94 = vshrl.u32 %v93, 7
  %v95 = vsub.s32 2, %v94
  %v96 = vrot.slane %v28, %v95
  %v97 = vmul.f32 %v83, %v96
  %v98 = vmul.f32 %v87, %v96
  %v99 = vmul.f32 %v91, %v96
  %v100 = vadd.f32 %v78, %v97
  %v101 = vadd.f32 %v79, %v98
  %v102 = vadd.f32 %v80, %v99
  %103 = vset.pattern.permute.xlu0 3
  %104 = vperm.xlu0 %103, %v19
  %v105 = vpop.permute.xlu0 %104
  %107 = vset.pattern.permute.xlu0 3
  %108 = vperm.xlu0 %107, %v20
  %v109 = vpop.permute.xlu0 %108
  %111 = vset.pattern.permute.xlu0 3
  %112 = vperm.xlu0 %111, %v21
  %v113 = vpop.permute.xlu0 %112
  %v115 = vlaneseq
  %v116 = vshrl.u32 %v115, 7
  %v117 = vsub.s32 3, %v116
  %v118 = vrot.slane %v28, %v117
  %v119 = vmul.f32 %v105, %v118
  %v120 = vmul.f32 %v109, %v118
  %v121 = vmul.f32 %v113, %v118
  %v122 = vadd.f32 %v100, %v119
  %v123 = vadd.f32 %v101, %v120
  %v124 = vadd.f32 %v102, %v121
  %v125 = vmul.f32 %v122, 0.70710677
  %v126 = vmul.f32 %v123, 0.70710677
  %v127 = vmul.f32 %v124, 0.70710677
  %129 = vset.pattern.permute.xlu0 0
  %130 = vperm.xlu0 %129, %v25
  %v131 = vpop.permute.xlu0 %130
  %134 = vset.pattern.permute.xlu0 0
  %135 = vperm.xlu0 %134, %v26
  %v136 = vpop.permute.xlu0 %135
  %139 = vset.pattern.permute.xlu0 0
  %140 = vperm.xlu0 %139, %v27
  %v141 = vpop.permute.xlu0 %140
  %v143 = vlaneseq
  %v144 = vshrl.u32 %v143, 7
  %v145 = vsub.s32 0, %v144
  %v146 = vrot.slane %v32, %v145
  %v147 = vmul.f32 %v131, %v146
  %v148 = vmul.f32 %v136, %v146
  %v149 = vmul.f32 %v141, %v146
  %150 = vset.pattern.permute.xlu0 1
  %151 = vperm.xlu0 %150, %v25
  %v152 = vpop.permute.xlu0 %151
  %154 = vset.pattern.permute.xlu0 1
  %155 = vperm.xlu0 %154, %v26
  %v156 = vpop.permute.xlu0 %155
  %158 = vset.pattern.permute.xlu0 1
  %159 = vperm.xlu0 %158, %v27
  %v160 = vpop.permute.xlu0 %159
  %v162 = vlaneseq
  %v163 = vshrl.u32 %v162, 7
  %v164 = vsub.s32 1, %v163
  %v165 = vrot.slane %v32, %v164
  %v166 = vmul.f32 %v152, %v165
  %v167 = vmul.f32 %v156, %v165
  %v168 = vmul.f32 %v160, %v165
  %v169 = vadd.f32 %v147, %v166
  %v170 = vadd.f32 %v148, %v167
  %v171 = vadd.f32 %v149, %v168
  %172 = vset.pattern.permute.xlu0 2
  %173 = vperm.xlu0 %172, %v25
  %v174 = vpop.permute.xlu0 %173
  %176 = vset.pattern.permute.xlu0 2
  %177 = vperm.xlu0 %176, %v26
  %v178 = vpop.permute.xlu0 %177
  %180 = vset.pattern.permute.xlu0 2
  %181 = vperm.xlu0 %180, %v27
  %v182 = vpop.permute.xlu0 %181
  %v184 = vlaneseq
  %v185 = vshrl.u32 %v184, 7
  %v186 = vsub.s32 2, %v185
  %v187 = vrot.slane %v32, %v186
  %v188 = vmul.f32 %v174, %v187
  %v189 = vmul.f32 %v178, %v187
  %v190 = vmul.f32 %v182, %v187
  %v191 = vadd.f32 %v169, %v188
  %v192 = vadd.f32 %v170, %v189
  %v193 = vadd.f32 %v171, %v190
  %194 = vset.pattern.permute.xlu0 3
  %195 = vperm.xlu0 %194, %v25
  %v196 = vpop.permute.xlu0 %195
  %198 = vset.pattern.permute.xlu0 3
  %199 = vperm.xlu0 %198, %v26
  %v200 = vpop.permute.xlu0 %199
  %202 = vset.pattern.permute.xlu0 3
  %203 = vperm.xlu0 %202, %v27
  %v204 = vpop.permute.xlu0 %203
  %v206 = vlaneseq
  %v207 = vshrl.u32 %v206, 7
  %v208 = vsub.s32 3, %v207
  %v209 = vrot.slane %v32, %v208
  %v210 = vmul.f32 %v196, %v209
  %v211 = vmul.f32 %v200, %v209
  %v212 = vmul.f32 %v204, %v209
  %v213 = vadd.f32 %v191, %v210
  %v214 = vadd.f32 %v192, %v211
  %v215 = vadd.f32 %v193, %v212
  %v216 = vlaneseq
  %v217 = vshrl.u32 %v216, 7
  %v218 = vsub.s32 0, %v217
  %v219 = vrot.slane %v22, %v218
  %v220 = vlaneseq
  %v221 = vshrl.u32 %v220, 7
  %v222 = vsub.s32 0, %v221
  %v223 = vrot.slane %v23, %v222
  %v224 = vlaneseq
  %v225 = vshrl.u32 %v224, 7
  %v226 = vsub.s32 0, %v225
  %v227 = vrot.slane %v24, %v226
  %229 = vset.pattern.permute.xlu0 0
  %230 = vperm.xlu0 %229, %v30
  %v231 = vpop.permute.xlu0 %230
  %v233 = vmul.f32 %v219, %v231
  %v234 = vmul.f32 %v223, %v231
  %v235 = vmul.f32 %v227, %v231
  %v236 = vlaneseq
  %v237 = vshrl.u32 %v236, 7
  %v238 = vsub.s32 1, %v237
  %v239 = vrot.slane %v22, %v238
  %v240 = vlaneseq
  %v241 = vshrl.u32 %v240, 7
  %v242 = vsub.s32 1, %v241
  %v243 = vrot.slane %v23, %v242
  %v244 = vlaneseq
  %v245 = vshrl.u32 %v244, 7
  %v246 = vsub.s32 1, %v245
  %v247 = vrot.slane %v24, %v246
  %248 = vset.pattern.permute.xlu0 1
  %249 = vperm.xlu0 %248, %v30
  %v250 = vpop.permute.xlu0 %249
  %v252 = vmul.f32 %v239, %v250
  %v253 = vmul.f32 %v243, %v250
  %v254 = vmul.f32 %v247, %v250
  %v255 = vadd.f32 %v233, %v252
  %v256 = vadd.f32 %v234, %v253
  %v257 = vadd.f32 %v235, %v254
  %v258 = vlaneseq
  %v259 = vshrl.u32 %v258, 7
  %v260 = vsub.s32 2, %v259
  %v261 = vrot.slane %v22, %v260
  %v262 = vlaneseq
  %v263 = vshrl.u32 %v262, 7
  %v264 = vsub.s32 2, %v263
  %v265 = vrot.slane %v23, %v264
  %v266 = vlaneseq
  %v267 = vshrl.u32 %v266, 7
  %v268 = vsub.s32 2, %v267
  %v269 = vrot.slane %v24, %v268
  %270 = vset.pattern.permute.xlu0 2
  %271 = vperm.xlu0 %270, %v30
  %v272 = vpop.permute.xlu0 %271
  %v274 = vmul.f32 %v261, %v272
  %v275 = vmul.f32 %v265, %v272
  %v276 = vmul.f32 %v269, %v272
  %v277 = vadd.f32 %v255, %v274
  %v278 = vadd.f32 %v256, %v275
  %v279 = vadd.f32 %v257, %v276
  %v280 = vlaneseq
  %v281 = vshrl.u32 %v280, 7
  %v282 = vsub.s32 3, %v281
  %v283 = vrot.slane %v22, %v282
  %v284 = vlaneseq
  %v285 = vshrl.u32 %v284, 7
  %v286 = vsub.s32 3, %v285
  %v287 = vrot.slane %v23, %v286
  %v288 = vlaneseq
  %v289 = vshrl.u32 %v288, 7
  %v290 = vsub.s32 3, %v289
  %v291 = vrot.slane %v24, %v290
  %292 = vset.pattern.permute.xlu0 3
  %293 = vperm.xlu0 %292, %v30
  %v294 = vpop.permute.xlu0 %293
  %v296 = vmul.f32 %v283, %v294
  %v297 = vmul.f32 %v287, %v294
  %v298 = vmul.f32 %v291, %v294
  %v299 = vadd.f32 %v277, %v296
  %v300 = vadd.f32 %v278, %v297
  %v301 = vadd.f32 %v279, %v298
  %303 = vset.pattern.permute.xlu0 0
  %304 = vperm.xlu0 %303, %v125
  %v305 = vpop.permute.xlu0 %304
  %308 = vset.pattern.permute.xlu0 0
  %309 = vperm.xlu0 %308, %v126
  %v310 = vpop.permute.xlu0 %309
  %313 = vset.pattern.permute.xlu0 0
  %314 = vperm.xlu0 %313, %v127
  %v315 = vpop.permute.xlu0 %314
  %v317 = vlaneseq
  %v318 = vshrl.u32 %v317, 7
  %v319 = vsub.s32 0, %v318
  %v320 = vrot.slane %v299, %v319
  %v321 = vlaneseq
  %v322 = vshrl.u32 %v321, 7
  %v323 = vsub.s32 0, %v322
  %v324 = vrot.slane %v300, %v323
  %v325 = vlaneseq
  %v326 = vshrl.u32 %v325, 7
  %v327 = vsub.s32 0, %v326
  %v328 = vrot.slane %v301, %v327
  %v329 = vmul.f32 %v305, %v320
  %v330 = vmul.f32 %v310, %v324
  %v331 = vmul.f32 %v315, %v328
  %332 = vset.pattern.permute.xlu0 1
  %333 = vperm.xlu0 %332, %v125
  %v334 = vpop.permute.xlu0 %333
  %336 = vset.pattern.permute.xlu0 1
  %337 = vperm.xlu0 %336, %v126
  %v338 = vpop.permute.xlu0 %337
  %340 = vset.pattern.permute.xlu0 1
  %341 = vperm.xlu0 %340, %v127
  %v342 = vpop.permute.xlu0 %341
  %v344 = vlaneseq
  %v345 = vshrl.u32 %v344, 7
  %v346 = vsub.s32 1, %v345
  %v347 = vrot.slane %v299, %v346
  %v348 = vlaneseq
  %v349 = vshrl.u32 %v348, 7
  %v350 = vsub.s32 1, %v349
  %v351 = vrot.slane %v300, %v350
  %v352 = vlaneseq
  %v353 = vshrl.u32 %v352, 7
  %v354 = vsub.s32 1, %v353
  %v355 = vrot.slane %v301, %v354
  %v356 = vmul.f32 %v334, %v347
  %v357 = vmul.f32 %v338, %v351
  %v358 = vmul.f32 %v342, %v355
  %v359 = vadd.f32 %v329, %v356
  %v360 = vadd.f32 %v330, %v357
  %v361 = vadd.f32 %v331, %v358
  %vm362 = vcmask 37888
  %v363 = vsel %vm362, %v359, -inf
  %364 = vmax.xlane.f32.xlu0 %v363
  %v365 = vpop.xlane.xlu0 %364
  %v366 = vsel %vm362, %v360, -inf
  %367 = vmax.xlane.f32.xlu0 %v366
  %v368 = vpop.xlane.xlu0 %367
  %v369 = vsel %vm362, %v361, -inf
  %370 = vmax.xlane.f32.xlu0 %v369
  %v371 = vpop.xlane.xlu0 %370
  %v372 = vsub.f32 %v359, %v365
  %v373 = vsub.f32 %v360, %v368
  %v374 = vsub.f32 %v361, %v371
  %v375 = vmul.f32 %v372, 1.442695
  %v376 = vpow.pop %v375
  %v377 = vmul.f32 %v373, 1.442695
  %v378 = vpow.pop %v377
  %v379 = vmul.f32 %v374, 1.442695
  %v380 = vpow.pop %v379
  %v381 = vsel %vm362, %v376, 0.0
  %382 = vadd.xlane.f32.xlu0 %v381
  %v383 = vpop.xlane.xlu0 %382
  %v384 = vsel %vm362, %v378, 0.0
  %385 = vadd.xlane.f32.xlu0 %v384
  %v386 = vpop.xlane.xlu0 %385
  %v387 = vsel %vm362, %v380, 0.0
  %388 = vadd.xlane.f32.xlu0 %v387
  %v389 = vpop.xlane.xlu0 %388
  %v390 = vrcp.pop %v383
  %v391 = vmul.f32 %v376, %v390
  %v392 = vrcp.pop %v386
  %v393 = vmul.f32 %v378, %v392
  %v394 = vrcp.pop %v389
  %v395 = vmul.f32 %v380, %v394
  %v396 = vadd.f32 %v391, 0.0
  %v397 = vadd.f32 %v393, 0.0
  %v398 = vadd.f32 %v395, 0.0
  %400 = vset.pattern.permute.xlu0 0
  %401 = vperm.xlu0 %400, %v391
  %v402 = vpop.permute.xlu0 %401
  %405 = vset.pattern.permute.xlu0 0
  %406 = vperm.xlu0 %405, %v393
  %v407 = vpop.permute.xlu0 %406
  %410 = vset.pattern.permute.xlu0 0
  %411 = vperm.xlu0 %410, %v395
  %v412 = vpop.permute.xlu0 %411
  %v414 = vlaneseq
  %v415 = vshrl.u32 %v414, 7
  %v416 = vsub.s32 0, %v415
  %v417 = vrot.slane %v213, %v416
  %v418 = vlaneseq
  %v419 = vshrl.u32 %v418, 7
  %v420 = vsub.s32 0, %v419
  %v421 = vrot.slane %v214, %v420
  %v422 = vlaneseq
  %v423 = vshrl.u32 %v422, 7
  %v424 = vsub.s32 0, %v423
  %v425 = vrot.slane %v215, %v424
  %v426 = vmul.f32 %v402, %v417
  %v427 = vmul.f32 %v407, %v421
  %v428 = vmul.f32 %v412, %v425
  %429 = vset.pattern.permute.xlu0 1
  %430 = vperm.xlu0 %429, %v391
  %v431 = vpop.permute.xlu0 %430
  %433 = vset.pattern.permute.xlu0 1
  %434 = vperm.xlu0 %433, %v393
  %v435 = vpop.permute.xlu0 %434
  %437 = vset.pattern.permute.xlu0 1
  %438 = vperm.xlu0 %437, %v395
  %v439 = vpop.permute.xlu0 %438
  %v441 = vlaneseq
  %v442 = vshrl.u32 %v441, 7
  %v443 = vsub.s32 1, %v442
  %v444 = vrot.slane %v213, %v443
  %v445 = vlaneseq
  %v446 = vshrl.u32 %v445, 7
  %v447 = vsub.s32 1, %v446
  %v448 = vrot.slane %v214, %v447
  %v449 = vlaneseq
  %v450 = vshrl.u32 %v449, 7
  %v451 = vsub.s32 1, %v450
  %v452 = vrot.slane %v215, %v451
  %v453 = vmul.f32 %v431, %v444
  %v454 = vmul.f32 %v435, %v448
  %v455 = vmul.f32 %v439, %v452
  %v456 = vadd.f32 %v426, %v453
  %v457 = vadd.f32 %v427, %v454
  %v458 = vadd.f32 %v428, %v455
  %459 = vset.pattern.permute.xlu0 2
  %460 = vperm.xlu0 %459, %v391
  %v461 = vpop.permute.xlu0 %460
  %463 = vset.pattern.permute.xlu0 2
  %464 = vperm.xlu0 %463, %v393
  %v465 = vpop.permute.xlu0 %464
  %467 = vset.pattern.permute.xlu0 2
  %468 = vperm.xlu0 %467, %v395
  %v469 = vpop.permute.xlu0 %468
  %v471 = vlaneseq
  %v472 = vshrl.u32 %v471, 7
  %v473 = vsub.s32 2, %v472
  %v474 = vrot.slane %v213, %v473
  %v475 = vlaneseq
  %v476 = vshrl.u32 %v475, 7
  %v477 = vsub.s32 2, %v476
  %v478 = vrot.slane %v214, %v477
  %v479 = vlaneseq
  %v480 = vshrl.u32 %v479, 7
  %v481 = vsub.s32 2, %v480
  %v482 = vrot.slane %v215, %v481
  %v483 = vmul.f32 %v461, %v474
  %v484 = vmul.f32 %v465, %v478
  %v485 = vmul.f32 %v469, %v482
  %v486 = vadd.f32 %v456, %v483
  %v487 = vadd.f32 %v457, %v484
  %v488 = vadd.f32 %v458, %v485
  %489 = vset.pattern.permute.xlu0 3
  %490 = vperm.xlu0 %489, %v391
  %v491 = vpop.permute.xlu0 %490
  %493 = vset.pattern.permute.xlu0 3
  %494 = vperm.xlu0 %493, %v393
  %v495 = vpop.permute.xlu0 %494
  %497 = vset.pattern.permute.xlu0 3
  %498 = vperm.xlu0 %497, %v395
  %v499 = vpop.permute.xlu0 %498
  %v501 = vlaneseq
  %v502 = vshrl.u32 %v501, 7
  %v503 = vsub.s32 3, %v502
  %v504 = vrot.slane %v213, %v503
  %v505 = vlaneseq
  %v506 = vshrl.u32 %v505, 7
  %v507 = vsub.s32 3, %v506
  %v508 = vrot.slane %v214, %v507
  %v509 = vlaneseq
  %v510 = vshrl.u32 %v509, 7
  %v511 = vsub.s32 3, %v510
  %v512 = vrot.slane %v215, %v511
  %v513 = vmul.f32 %v491, %v504
  %v514 = vmul.f32 %v495, %v508
  %v515 = vmul.f32 %v499, %v512
  %v516 = vadd.f32 %v486, %v513
  %v517 = vadd.f32 %v487, %v514
  %v518 = vadd.f32 %v488, %v515
  %519 = vset.pattern.permute.xlu0 4
  %520 = vperm.xlu0 %519, %v391
  %v521 = vpop.permute.xlu0 %520
  %523 = vset.pattern.permute.xlu0 4
  %524 = vperm.xlu0 %523, %v393
  %v525 = vpop.permute.xlu0 %524
  %527 = vset.pattern.permute.xlu0 4
  %528 = vperm.xlu0 %527, %v395
  %v529 = vpop.permute.xlu0 %528
  %v531 = vlaneseq
  %v532 = vshrl.u32 %v531, 7
  %v533 = vsub.s32 4, %v532
  %v534 = vrot.slane %v213, %v533
  %v535 = vlaneseq
  %v536 = vshrl.u32 %v535, 7
  %v537 = vsub.s32 4, %v536
  %v538 = vrot.slane %v214, %v537
  %v539 = vlaneseq
  %v540 = vshrl.u32 %v539, 7
  %v541 = vsub.s32 4, %v540
  %v542 = vrot.slane %v215, %v541
  %v543 = vmul.f32 %v521, %v534
  %v544 = vmul.f32 %v525, %v538
  %v545 = vmul.f32 %v529, %v542
  %v546 = vadd.f32 %v516, %v543
  %v547 = vadd.f32 %v517, %v544
  %v548 = vadd.f32 %v518, %v545
  %550 = vset.pattern.permute.xlu0 0
  %551 = vperm.xlu0 %550, %v546
  %v552 = vpop.permute.xlu0 %551
  %555 = vset.pattern.permute.xlu0 0
  %556 = vperm.xlu0 %555, %v547
  %v557 = vpop.permute.xlu0 %556
  %560 = vset.pattern.permute.xlu0 0
  %561 = vperm.xlu0 %560, %v548
  %v562 = vpop.permute.xlu0 %561
  %v564 = vlaneseq
  %v565 = vshrl.u32 %v564, 7
  %v566 = vsub.s32 0, %v565
  %v567 = vrot.slane %v34, %v566
  %v568 = vmul.f32 %v552, %v567
  %v569 = vmul.f32 %v557, %v567
  %v570 = vmul.f32 %v562, %v567
  %v571 = vadd.f32 %v568, 0.0
  %v572 = vadd.f32 %v569, 0.0
  %v573 = vadd.f32 %v570, 0.0
  %574 = vset.pattern.permute.xlu0 1
  %575 = vperm.xlu0 %574, %v546
  %v576 = vpop.permute.xlu0 %575
  %578 = vset.pattern.permute.xlu0 1
  %579 = vperm.xlu0 %578, %v547
  %v580 = vpop.permute.xlu0 %579
  %582 = vset.pattern.permute.xlu0 1
  %583 = vperm.xlu0 %582, %v548
  %v584 = vpop.permute.xlu0 %583
  %v586 = vlaneseq
  %v587 = vshrl.u32 %v586, 7
  %v588 = vsub.s32 1, %v587
  %v589 = vrot.slane %v34, %v588
  %v590 = vmul.f32 %v576, %v589
  %v591 = vmul.f32 %v580, %v589
  %v592 = vmul.f32 %v584, %v589
  %v593 = vadd.f32 %v571, %v590
  %v594 = vadd.f32 %v572, %v591
  %v595 = vadd.f32 %v573, %v592
  %596 = vset.pattern.permute.xlu0 2
  %597 = vperm.xlu0 %596, %v125
  %v598 = vpop.permute.xlu0 %597
  %600 = vset.pattern.permute.xlu0 2
  %601 = vperm.xlu0 %600, %v126
  %v602 = vpop.permute.xlu0 %601
  %604 = vset.pattern.permute.xlu0 2
  %605 = vperm.xlu0 %604, %v127
  %v606 = vpop.permute.xlu0 %605
  %v608 = vlaneseq
  %v609 = vshrl.u32 %v608, 7
  %v610 = vsub.s32 2, %v609
  %v611 = vrot.slane %v299, %v610
  %v612 = vlaneseq
  %v613 = vshrl.u32 %v612, 7
  %v614 = vsub.s32 2, %v613
  %v615 = vrot.slane %v300, %v614
  %v616 = vlaneseq
  %v617 = vshrl.u32 %v616, 7
  %v618 = vsub.s32 2, %v617
  %v619 = vrot.slane %v301, %v618
  %v620 = vmul.f32 %v598, %v611
  %v621 = vmul.f32 %v602, %v615
  %v622 = vmul.f32 %v606, %v619
  %623 = vset.pattern.permute.xlu0 3
  %624 = vperm.xlu0 %623, %v125
  %v625 = vpop.permute.xlu0 %624
  %627 = vset.pattern.permute.xlu0 3
  %628 = vperm.xlu0 %627, %v126
  %v629 = vpop.permute.xlu0 %628
  %631 = vset.pattern.permute.xlu0 3
  %632 = vperm.xlu0 %631, %v127
  %v633 = vpop.permute.xlu0 %632
  %v635 = vlaneseq
  %v636 = vshrl.u32 %v635, 7
  %v637 = vsub.s32 3, %v636
  %v638 = vrot.slane %v299, %v637
  %v639 = vlaneseq
  %v640 = vshrl.u32 %v639, 7
  %v641 = vsub.s32 3, %v640
  %v642 = vrot.slane %v300, %v641
  %v643 = vlaneseq
  %v644 = vshrl.u32 %v643, 7
  %v645 = vsub.s32 3, %v644
  %v646 = vrot.slane %v301, %v645
  %v647 = vmul.f32 %v625, %v638
  %v648 = vmul.f32 %v629, %v642
  %v649 = vmul.f32 %v633, %v646
  %v650 = vadd.f32 %v620, %v647
  %v651 = vadd.f32 %v621, %v648
  %v652 = vadd.f32 %v622, %v649
  %v653 = vsel %vm362, %v650, -inf
  %654 = vmax.xlane.f32.xlu0 %v653
  %v655 = vpop.xlane.xlu0 %654
  %v656 = vsel %vm362, %v651, -inf
  %657 = vmax.xlane.f32.xlu0 %v656
  %v658 = vpop.xlane.xlu0 %657
  %v659 = vsel %vm362, %v652, -inf
  %660 = vmax.xlane.f32.xlu0 %v659
  %v661 = vpop.xlane.xlu0 %660
  %v662 = vsub.f32 %v650, %v655
  %v663 = vsub.f32 %v651, %v658
  %v664 = vsub.f32 %v652, %v661
  %v665 = vmul.f32 %v662, 1.442695
  %v666 = vpow.pop %v665
  %v667 = vmul.f32 %v663, 1.442695
  %v668 = vpow.pop %v667
  %v669 = vmul.f32 %v664, 1.442695
  %v670 = vpow.pop %v669
  %v671 = vsel %vm362, %v666, 0.0
  %672 = vadd.xlane.f32.xlu0 %v671
  %v673 = vpop.xlane.xlu0 %672
  %v674 = vsel %vm362, %v668, 0.0
  %675 = vadd.xlane.f32.xlu0 %v674
  %v676 = vpop.xlane.xlu0 %675
  %v677 = vsel %vm362, %v670, 0.0
  %678 = vadd.xlane.f32.xlu0 %v677
  %v679 = vpop.xlane.xlu0 %678
  %v680 = vrcp.pop %v673
  %v681 = vmul.f32 %v666, %v680
  %v682 = vrcp.pop %v676
  %v683 = vmul.f32 %v668, %v682
  %v684 = vrcp.pop %v679
  %v685 = vmul.f32 %v670, %v684
  %v686 = vadd.f32 %v396, %v681
  %v687 = vadd.f32 %v397, %v683
  %v688 = vadd.f32 %v398, %v685
  %690 = vset.pattern.permute.xlu0 0
  %691 = vperm.xlu0 %690, %v681
  %v692 = vpop.permute.xlu0 %691
  %695 = vset.pattern.permute.xlu0 0
  %696 = vperm.xlu0 %695, %v683
  %v697 = vpop.permute.xlu0 %696
  %700 = vset.pattern.permute.xlu0 0
  %701 = vperm.xlu0 %700, %v685
  %v702 = vpop.permute.xlu0 %701
  %v704 = vmul.f32 %v692, %v417
  %v705 = vmul.f32 %v697, %v421
  %v706 = vmul.f32 %v702, %v425
  %707 = vset.pattern.permute.xlu0 1
  %708 = vperm.xlu0 %707, %v681
  %v709 = vpop.permute.xlu0 %708
  %711 = vset.pattern.permute.xlu0 1
  %712 = vperm.xlu0 %711, %v683
  %v713 = vpop.permute.xlu0 %712
  %715 = vset.pattern.permute.xlu0 1
  %716 = vperm.xlu0 %715, %v685
  %v717 = vpop.permute.xlu0 %716
  %v719 = vmul.f32 %v709, %v444
  %v720 = vmul.f32 %v713, %v448
  %v721 = vmul.f32 %v717, %v452
  %v722 = vadd.f32 %v704, %v719
  %v723 = vadd.f32 %v705, %v720
  %v724 = vadd.f32 %v706, %v721
  %725 = vset.pattern.permute.xlu0 2
  %726 = vperm.xlu0 %725, %v681
  %v727 = vpop.permute.xlu0 %726
  %729 = vset.pattern.permute.xlu0 2
  %730 = vperm.xlu0 %729, %v683
  %v731 = vpop.permute.xlu0 %730
  %733 = vset.pattern.permute.xlu0 2
  %734 = vperm.xlu0 %733, %v685
  %v735 = vpop.permute.xlu0 %734
  %v737 = vmul.f32 %v727, %v474
  %v738 = vmul.f32 %v731, %v478
  %v739 = vmul.f32 %v735, %v482
  %v740 = vadd.f32 %v722, %v737
  %v741 = vadd.f32 %v723, %v738
  %v742 = vadd.f32 %v724, %v739
  %743 = vset.pattern.permute.xlu0 3
  %744 = vperm.xlu0 %743, %v681
  %v745 = vpop.permute.xlu0 %744
  %747 = vset.pattern.permute.xlu0 3
  %748 = vperm.xlu0 %747, %v683
  %v749 = vpop.permute.xlu0 %748
  %751 = vset.pattern.permute.xlu0 3
  %752 = vperm.xlu0 %751, %v685
  %v753 = vpop.permute.xlu0 %752
  %v755 = vmul.f32 %v745, %v504
  %v756 = vmul.f32 %v749, %v508
  %v757 = vmul.f32 %v753, %v512
  %v758 = vadd.f32 %v740, %v755
  %v759 = vadd.f32 %v741, %v756
  %v760 = vadd.f32 %v742, %v757
  %761 = vset.pattern.permute.xlu0 4
  %762 = vperm.xlu0 %761, %v681
  %v763 = vpop.permute.xlu0 %762
  %765 = vset.pattern.permute.xlu0 4
  %766 = vperm.xlu0 %765, %v683
  %v767 = vpop.permute.xlu0 %766
  %769 = vset.pattern.permute.xlu0 4
  %770 = vperm.xlu0 %769, %v685
  %v771 = vpop.permute.xlu0 %770
  %v773 = vmul.f32 %v763, %v534
  %v774 = vmul.f32 %v767, %v538
  %v775 = vmul.f32 %v771, %v542
  %v776 = vadd.f32 %v758, %v773
  %v777 = vadd.f32 %v759, %v774
  %v778 = vadd.f32 %v760, %v775
  %780 = vset.pattern.permute.xlu0 2
  %781 = vperm.xlu0 %780, %v776
  %v782 = vpop.permute.xlu0 %781
  %785 = vset.pattern.permute.xlu0 2
  %786 = vperm.xlu0 %785, %v777
  %v787 = vpop.permute.xlu0 %786
  %790 = vset.pattern.permute.xlu0 2
  %791 = vperm.xlu0 %790, %v778
  %v792 = vpop.permute.xlu0 %791
  %v794 = vlaneseq
  %v795 = vshrl.u32 %v794, 7
  %v796 = vsub.s32 2, %v795
  %v797 = vrot.slane %v34, %v796
  %v798 = vmul.f32 %v782, %v797
  %v799 = vmul.f32 %v787, %v797
  %v800 = vmul.f32 %v792, %v797
  %v801 = vadd.f32 %v593, %v798
  %v802 = vadd.f32 %v594, %v799
  %v803 = vadd.f32 %v595, %v800
  %804 = vset.pattern.permute.xlu0 3
  %805 = vperm.xlu0 %804, %v776
  %v806 = vpop.permute.xlu0 %805
  %808 = vset.pattern.permute.xlu0 3
  %809 = vperm.xlu0 %808, %v777
  %v810 = vpop.permute.xlu0 %809
  %812 = vset.pattern.permute.xlu0 3
  %813 = vperm.xlu0 %812, %v778
  %v814 = vpop.permute.xlu0 %813
  %v816 = vlaneseq
  %v817 = vshrl.u32 %v816, 7
  %v818 = vsub.s32 3, %v817
  %v819 = vrot.slane %v34, %v818
  %v820 = vmul.f32 %v806, %v819
  %v821 = vmul.f32 %v810, %v819
  %v822 = vmul.f32 %v814, %v819
  %v823 = vadd.f32 %v801, %v820
  %v824 = vadd.f32 %v802, %v821
  %v825 = vadd.f32 %v803, %v822
  %v826 = vlaneseq
  %v827 = vshrl.u32 %v826, 7
  %v828 = vsub.s32 0, %v827
  %v829 = vrot.slane %v36, %v828
  %v830 = vadd.f32 %v823, %v829
  %v831 = vadd.f32 %v824, %v829
  %v832 = vadd.f32 %v825, %v829
  %vm833 = vcmask 29696
  %834 = vst.msk [vmem:[%s4] sm:$0x3f] %vm833, %v830
  %835 = vst.msk [vmem:[%s4 + $0x8] sm:$0x3f] %vm833, %v831
  %836 = vst.msk [vmem:[%s4 + $0x10] sm:$0x3f] %vm833, %v832
  %v837 = vmul.f32 %v686, 0.5
  %v838 = vmul.f32 %v687, 0.5
  %v839 = vmul.f32 %v688, 0.5
  %840 = vst.msk [vmem:[%s5] sm:$0x3f] %vm362, %v837
  %841 = vst.msk [vmem:[%s5 + $0x8] sm:$0x3f] %vm362, %v838
  %842 = vst.msk [vmem:[%s5 + $0x10] sm:$0x3f] %vm362, %v839
  // Predicated region
  $region18: #{multihead_attention.1} parent=0 // pred_check
    _
  $region19: #{multihead_attention.1} parent=0 // pred_check_branch
    %844 = sbr.rel (0) target = $region21
  $region20: #{multihead_attention.1} parent=0 // pred_region
    _
  $region21: #{multihead_attention.1} parent=0 // pred_fallthru
    _
  // Predicated region
  $region22: #{multihead_attention.1} parent=0 // pred_check
    _
  $region23: #{multihead_attention.1} parent=0 // pred_check_branch
    %846 = sbr.rel (0) target = $region25
  $region24: #{multihead_attention.1} parent=0 // pred_region
    _
  $region25: #{multihead_attention.1} parent=0 // pred_fallthru
    _
  // Predicated region
  $region26: #{multihead_attention.1} parent=0 // pred_check
    _
  $region27: #{multihead_attention.1} parent=0 // pred_check_branch
    %848 = sbr.rel (0) target = $region29
  $region28: #{multihead_attention.1} parent=0 // pred_region
    _
  $region29: #{multihead_attention.1} parent=0 // pred_fallthru
    _
  // Predicated region
  $region30: #{multihead_attention.1} parent=0 // pred_check
    _
  $region31: #{multihead_attention.1} parent=0 // pred_check_branch
    %850 = sbr.rel (0) target = $region33
  $region32: #{multihead_attention.1} parent=0 // pred_region
    _
  $region33: #{multihead_attention.1} parent=0 // pred_fallthru
    _

</llo_original>
